<compile_context>
chip_gen: v7x
topology: tpu7x:2x2x1
jax: 0.10.0
libtpu: 0.0.40
codegen_flags: <defaults>
</compile_context>

<pallas_src>
import functools

import jax
import jax.numpy as jnp
from jax.experimental import pallas as pl
from jax.experimental.pallas import tpu as pltpu

_PER_BUFFER_BYTE_CAP = 8 << 20  # x-block size beyond which per-step overhead is already negligible


def _round_up(x, m):
    return (x + m - 1) // m * m


def _physical_vmem_bytes():
    try:
        return int(pltpu.get_tpu_info().vmem_capacity_bytes)
    except Exception:
        return 64 << 20  # v7x per-TensorCore physical VMEM (worst case)


def _choose_b_block(B):
    # v7x has 2 TensorCores: give the "parallel" batch axis >=2 blocks when the
    # per-block sublane count stays a multiple of 8 (output-tile constraint).
    if B % 16 == 0:
        return B // 2
    return B


def moe_kernel(x_ref, w_ref, b_ref, o_ref, pooled_acc, *,
               num_mixtures, o_pad, t_blk, t_rem):
    # x_ref      : [b_blk, t_blk, D_eff] one chunk of the (densified) seq axis
    # w_ref      : [D_eff, G*O_pad]      all 2M+1 linear maps, lane-concatenated,
    #                                    pre-scaled by 1/T (GAP folded in)
    # b_ref      : [1, G*O_pad]          matching biases
    # o_ref      : [b_blk, O_pad]        lane-dense output, written on last T step
    # pooled_acc : [b_blk, D_eff] f32    running sum over the sequence axis
    #
    # Lane-group layout contract (must match pack_moe_params):
    #   groups 0..M   -> gate m   (M+1 groups, includes the dummy gate M)
    #   groups M+1..2M-> expert m (M groups)
    M = num_mixtures
    t = pl.program_id(1)
    nt = pl.num_programs(1)

    @pl.when(t == 0)
    def _():
        pooled_acc[...] = jnp.zeros_like(pooled_acc)

    # AdaptiveAvgPool1d(1): accumulate the sum over T in f32 (explicit cast so a
    # bf16 stream still pools in f32; 1/T is folded into w_ref offline).
    x_chunk = x_ref[...].astype(jnp.float32)
    if t_rem:
        # cdiv grid: mask the overhanging rows of the final (partial) block.
        row = jax.lax.broadcasted_iota(jnp.int32, x_chunk.shape, 1)
        valid = jnp.where(t == nt - 1, t_rem, t_blk)
        x_chunk = jnp.where(row < valid, x_chunk, 0.0)
    pooled_acc[...] += jnp.sum(x_chunk, axis=1)

    @pl.when(t == nt - 1)
    def _():
        # One fused MXU pass for all gate + expert linears.
        acts = (
            jnp.dot(pooled_acc[...], w_ref[...], preferred_element_type=jnp.float32)
            + b_ref[...]
        )  # [b_blk, G*O_pad]

        # Static, 128-aligned lane slices per mixture group.
        g = [acts[:, m * o_pad:(m + 1) * o_pad] for m in range(M + 1)]

        # Softmax across the mixture axis, slab-wise (dummy gate included in
        # the denominator, matching the PyTorch softmax over M+1 mixtures).
        gmax = g[0]
        for gi in g[1:]:
            gmax = jnp.maximum(gmax, gi)
        ge = [jnp.exp(gi - gmax) for gi in g]
        gden = ge[0]
        for gi in ge[1:]:
            gden = gden + gi

        # Experts: sigmoid(linear), weighted by the UNnormalized gates; the
        # softmax denominator is applied as a log subtraction (EUP) instead of
        # a reciprocal + M normalizing multiplies (VPU).
        mix = jnp.zeros_like(gden)
        for m in range(M):
            e = acts[:, (M + 1 + m) * o_pad:(M + 2 + m) * o_pad]
            mix = mix + ge[m] * jax.nn.sigmoid(e)

        o_ref[...] = jnp.log(mix) - jnp.log(gden)


def pack_moe_params(Wg, bg, We, be, *, out_num, num_mixtures, seq_len):
    """One-time repack of PyTorch nn.Linear params into the kernel layout.

    PyTorch flat output index = o * (M(+1)) + m  (because of .view(-1, O, M)).
    Layout contract (must match moe_kernel's static lane slices):
      lane group m in [0, M]      -> gate m   (incl. dummy gate M)
      lane group M+1+m, m in [0,M)-> expert m
    Returns:
      w_all : [r*D, (2M+1)*O_pad]  mixture-major, lane-padded to 128, scaled by
              1/seq_len; tiled r-fold along the contraction dim when D < 128 so
              the wrapper can lane-densify x to [B, T/r, r*D].
      b_all : [1, (2M+1)*O_pad]
    Call ONCE at parameter-load time, not per forward call.
    """
    M = num_mixtures
    Mp1 = M + 1
    D = Wg.shape[1]
    O = out_num
    O_pad = _round_up(O, 128)
    pad = O_pad - O

    wg_k = Wg.reshape(O, Mp1, D).transpose(1, 2, 0)  # [M+1, D, O]
    we_k = We.reshape(O, M, D).transpose(1, 2, 0)    # [M,   D, O]
    bg_k = bg.reshape(O, Mp1).transpose(1, 0)        # [M+1, O]
    be_k = be.reshape(O, M).transpose(1, 0)          # [M,   O]

    w_all = jnp.concatenate([wg_k, we_k], axis=0)    # [2M+1, D, O]
    b_all = jnp.concatenate([bg_k, be_k], axis=0)    # [2M+1, O]
    if pad:
        w_all = jnp.pad(w_all, ((0, 0), (0, 0), (0, pad)))
        b_all = jnp.pad(b_all, ((0, 0), (0, pad)))

    G = 2 * M + 1
    # Fold the AdaptiveAvgPool 1/T scale into the weights (biases untouched).
    w_all = w_all.transpose(1, 0, 2).reshape(D, G * O_pad) * (1.0 / seq_len)
    b_all = b_all.reshape(1, G * O_pad)

    # Lane densification of the contraction dim: if D < 128, the wrapper folds
    # r = 128/D sequence steps into the feature axis; tiling the weights r-fold
    # keeps the final dot mathematically identical.
    if D < 128 and 128 % D == 0:
        r = 128 // D
        w_all = jnp.tile(w_all, (r, 1))              # [r*D, G*O_pad]

    return w_all.astype(jnp.float32), b_all.astype(jnp.float32)


def moe_forward(x, w_all, b_all, *, out_num, num_mixtures,
                stream_dtype=None, max_t_block=None):
    """x: [B, T, D]; w_all/b_all from pack_moe_params. Returns [B, out_num].

    stream_dtype: optionally stream x as e.g. jnp.bfloat16 (halves HBM traffic;
      pooling and the MXU accumulation stay f32).
    max_t_block: optional cap on the sequence tile (mainly for testing).
    """
    B, T, D = x.shape
    G = 2 * num_mixtures + 1
    assert b_all.shape[-1] % G == 0
    O_pad = b_all.shape[-1] // G
    d_eff = w_all.shape[0]
    r = d_eff // D
    assert r * D == d_eff, "packed weights inconsistent with input feature dim"

    if stream_dtype is not None and x.dtype != stream_dtype:
        x = x.astype(stream_dtype)

    # Lane densification: fold r sequence steps into the feature axis so the
    # lane dim is 128-wide.  Zero-padding T to a multiple of r is safe because
    # zeros do not change the pooled sum (1/T was folded with the true T).
    if r > 1:
        pad_t = (-T) % r
        if pad_t:
            x = jnp.pad(x, ((0, 0), (0, pad_t), (0, 0)))
        T_eff = (T + pad_t) // r
        x = x.reshape(B, T_eff, d_eff)
    else:
        T_eff = T

    dtype_bytes = x.dtype.itemsize
    b_blk = _choose_b_block(B)

    # --- VMEM budget -> sequence tile --------------------------------------
    phys_vmem = _physical_vmem_bytes()                 # 64 MiB v7x, 128 MiB v5e/v6e
    vmem_limit = int(min(phys_vmem * 3 // 4, 96 << 20))

    w_bytes = w_all.size * w_all.dtype.itemsize        # single-buffered (Buffered(1))
    bias_bytes = b_all.size * b_all.dtype.itemsize
    out_bytes = 2 * b_blk * O_pad * 4
    acc_bytes = b_blk * d_eff * 4
    fixed = w_bytes + bias_bytes + out_bytes + acc_bytes + (2 << 20)  # + compiler slack

    x_budget = max(vmem_limit - fixed, 1 << 20)
    rows_by_budget = x_budget // (2 * b_blk * d_eff * dtype_bytes)    # 2 pipeline buffers
    rows_by_cap = _PER_BUFFER_BYTE_CAP // (b_blk * d_eff * dtype_bytes)
    t_blk = max(1, min(rows_by_budget, rows_by_cap))
    if max_t_block is not None:
        t_blk = min(t_blk, max_t_block)
    align = 16 if dtype_bytes == 2 else 8
    if t_blk >= T_eff:
        t_blk = T_eff                                   # full axis: no (8,128) constraint
    else:
        t_blk = max(align, (t_blk // align) * align)
    nt = pl.cdiv(T_eff, t_blk)
    t_rem = T_eff % t_blk                               # masked tail block if nonzero

    grid = (B // b_blk, nt)

    cost = pl.CostEstimate(
        flops=int(B * T_eff * d_eff + 2 * B * d_eff * G * O_pad),
        transcendentals=int(B * O_pad * (2 * num_mixtures + 3)),
        bytes_accessed=int(x.size * dtype_bytes + w_bytes + bias_bytes + B * O_pad * 4),
    )

    out = pl.pallas_call(
        functools.partial(
            moe_kernel,
            num_mixtures=num_mixtures, o_pad=O_pad, t_blk=t_blk, t_rem=t_rem,
        ),
        out_shape=jax.ShapeDtypeStruct((B, O_pad), jnp.float32),
        grid_spec=pltpu.PrefetchScalarGridSpec(
            num_scalar_prefetch=0,
            grid=grid,
            in_specs=[
                # x chunk (double-buffered stream).
                pl.BlockSpec((b_blk, t_blk, d_eff), lambda b, t: (b, t, 0)),
                # Resident weights / bias: constant block index -> fetched once;
                # single-buffered so they don't eat 2x VMEM at production sizes.
                pl.BlockSpec((d_eff, G * O_pad), lambda b, t: (0, 0),
                             pipeline_mode=pl.Buffered(1)),
                pl.BlockSpec((1, G * O_pad), lambda b, t: (0, 0),
                             pipeline_mode=pl.Buffered(1)),
            ],
            out_specs=pl.BlockSpec((b_blk, O_pad), lambda b, t: (b, 0)),
            scratch_shapes=[pltpu.VMEM((b_blk, d_eff), jnp.float32)],
        ),
        compiler_params=pltpu.CompilerParams(
            # Batch blocks are independent ("parallel" -> v7x megacore sharding);
            # the sequence axis is a reduction -> "arbitrary".
            dimension_semantics=("parallel", "arbitrary"),
            vmem_limit_bytes=vmem_limit,
        ),
        cost_estimate=cost,
    )(x, w_all, b_all)

    # Strip the lane padding added for a dense (unmasked) output store.
    return out[:, :out_num]


def moe_ref(x, Wg, bg, We, be, out_num, num_mixtures):
    """Pure-JAX reference mirroring the PyTorch forward exactly."""
    pooled = jnp.mean(x, axis=1)                                    # GAP over seq
    ga = pooled @ Wg.T + bg
    ga = ga.reshape(-1, out_num, num_mixtures + 1)
    ga = jax.nn.softmax(ga, axis=2)
    ea = pooled @ We.T + be
    ea = ea.reshape(-1, out_num, num_mixtures)
    ea = jax.nn.sigmoid(ea)
    out = (ga[:, :, :-1] * ea).sum(axis=2)
    return jnp.log(out)


if __name__ == "__main__":
    # Small shapes consistent with the module:
    #   data_length=[24, 8]  -> D = 32
    #   class_length=[5, 11] -> out_num = 16
    #   num_mixtures = 2, batch B = 2, seq T = 8
    B, T, D = 2, 8, 32
    out_num = 16
    M = 2

    key = jax.random.PRNGKey(0)
    kx, kwg, kbg, kwe, kbe, kx2 = jax.random.split(key, 6)

    x = jax.random.normal(kx, (B, T, D), dtype=jnp.float32)
    # PyTorch nn.Linear layout: weight [out_features, in_features], bias [out_features]
    Wg = 0.1 * jax.random.normal(kwg, (out_num * (M + 1), D), dtype=jnp.float32)
    bg = 0.1 * jax.random.normal(kbg, (out_num * (M + 1),), dtype=jnp.float32)
    We = 0.1 * jax.random.normal(kwe, (out_num * M, D), dtype=jnp.float32)
    be = 0.1 * jax.random.normal(kbe, (out_num * M,), dtype=jnp.float32)

    # One-time weight repack (hoisted out of the per-call path).
    w_all, b_all = pack_moe_params(
        Wg, bg, We, be, out_num=out_num, num_mixtures=M, seq_len=T
    )

    # 1) f32 path, single T step.
    fwd = jax.jit(functools.partial(moe_forward, out_num=out_num, num_mixtures=M))
    out = jax.block_until_ready(fwd(x, w_all, b_all))
    ref = moe_ref(x, Wg, bg, We, be, out_num, M)
    assert out.shape == (B, out_num)
    assert jnp.allclose(out, ref, atol=1e-5, rtol=1e-5), (
        f"f32 max abs diff = {jnp.max(jnp.abs(out - ref))}"
    )

    # 2) Multi-step sequence reduction with a masked tail block (T_eff=10, t_blk=8).
    T2 = 40
    x2 = jax.random.normal(kx2, (B, T2, D), dtype=jnp.float32)
    w2, b2 = pack_moe_params(Wg, bg, We, be, out_num=out_num, num_mixtures=M, seq_len=T2)
    fwd2 = jax.jit(functools.partial(
        moe_forward, out_num=out_num, num_mixtures=M, max_t_block=8))
    out2 = jax.block_until_ready(fwd2(x2, w2, b2))
    ref2 = moe_ref(x2, Wg, bg, We, be, out_num, M)
    assert jnp.allclose(out2, ref2, atol=1e-5, rtol=1e-5), (
        f"tiled max abs diff = {jnp.max(jnp.abs(out2 - ref2))}"
    )

    # 3) bf16 streaming path (production HBM-traffic saver), loose tolerance.
    fwd3 = jax.jit(functools.partial(
        moe_forward, out_num=out_num, num_mixtures=M, stream_dtype=jnp.bfloat16))
    out3 = jax.block_until_ready(fwd3(x, w_all, b_all))
    assert jnp.allclose(out3, ref, atol=5e-2, rtol=5e-2), (
        f"bf16 max abs diff = {jnp.max(jnp.abs(out3 - ref))}"
    )

    print("KERNEL_OK")
</pallas_src>

<mosaic_0001>
module attributes {stable_mosaic.version = 11 : i64} {
  func.func @moe_kernel(%arg0: i32, %arg1: i32, %arg2: memref<2x2x128xf32, #tpu.memory_space<vmem>>, %arg3: memref<128x640xf32, #tpu.memory_space<vmem>>, %arg4: memref<1x640xf32, #tpu.memory_space<vmem>>, %arg5: memref<2x128xf32, #tpu.memory_space<vmem>>, %arg6: memref<2x128xf32, #tpu.memory_space<vmem>>) attributes {dimension_semantics = [#tpu.dimension_semantics<parallel>, #tpu.dimension_semantics<arbitrary>], iteration_bounds = array<i64: 1, 1>, scalar_prefetch = 0 : i64, scratch_operands = 1 : i64, tpu.core_type = #tpu.core_type<tc>, window_params = [{transform_indices = @transform_0, window_bounds = array<i64: 2, 2, 128>}, {pipeline_mode = #tpu.pipeline_mode<synchronous>, transform_indices = @transform_1, window_bounds = array<i64: 128, 640>}, {pipeline_mode = #tpu.pipeline_mode<synchronous>, transform_indices = @transform_2, window_bounds = array<i64: 1, 640>}, {transform_indices = @transform_3, window_bounds = array<i64: 2, 128>}]} {
    %c0_i32 = arith.constant 0 : i32
    %0 = arith.cmpi eq, %arg1, %c0_i32 : i32
    %1 = arith.extui %0 : i1 to i32
    %c0_i32_0 = arith.constant 0 : i32
    %2 = arith.cmpi ne, %1, %c0_i32_0 : i32
    scf.if %2 {
      %cst_9 = arith.constant 0.000000e+00 : f32
      %11 = vector.broadcast %cst_9 : f32 to vector<2x128xf32>
      %c0_10 = arith.constant 0 : index
      %c0_11 = arith.constant 0 : index
      %12 = vector.load %arg6[%c0_10, %c0_11] : memref<2x128xf32, #tpu.memory_space<vmem>>, vector<2x128xf32>
      tpu.vector_store %arg6[%c0_10, %c0_11], %11 {strides = array<i32>} : memref<2x128xf32, #tpu.memory_space<vmem>>, vector<2x128xf32>,
    } else {
    }
    %c0 = arith.constant 0 : index
    %c0_1 = arith.constant 0 : index
    %c0_2 = arith.constant 0 : index
    %3 = vector.load %arg2[%c0, %c0_1, %c0_2] : memref<2x2x128xf32, #tpu.memory_space<vmem>>, vector<2x2x128xf32>
    %c0_3 = arith.constant 0 : index
    %c0_4 = arith.constant 0 : index
    %4 = vector.load %arg6[%c0_3, %c0_4] : memref<2x128xf32, #tpu.memory_space<vmem>>, vector<2x128xf32>
    %cst = arith.constant dense<0.000000e+00> : vector<2x128xf32>
    %5 = vector.multi_reduction <add>, %3, %cst [1] : vector<2x2x128xf32> to vector<2x128xf32>
    %6 = arith.addf %4, %5 : vector<2x128xf32>
    %c0_5 = arith.constant 0 : index
    %c0_6 = arith.constant 0 : index
    %7 = vector.load %arg6[%c0_5, %c0_6] : memref<2x128xf32, #tpu.memory_space<vmem>>, vector<2x128xf32>
    tpu.vector_store %arg6[%c0_5, %c0_6], %6 {strides = array<i32>} : memref<2x128xf32, #tpu.memory_space<vmem>>, vector<2x128xf32>,
    %c0_i32_7 = arith.constant 0 : i32
    %8 = arith.cmpi eq, %arg1, %c0_i32_7 : i32
    %9 = arith.extui %8 : i1 to i32
    %c0_i32_8 = arith.constant 0 : i32
    %10 = arith.cmpi ne, %9, %c0_i32_8 : i32
    scf.if %10 {
      %c0_9 = arith.constant 0 : index
      %c0_10 = arith.constant 0 : index
      %11 = vector.load %arg6[%c0_9, %c0_10] : memref<2x128xf32, #tpu.memory_space<vmem>>, vector<2x128xf32>
      %c0_11 = arith.constant 0 : index
      %c0_12 = arith.constant 0 : index
      %12 = vector.load %arg3[%c0_11, %c0_12] : memref<128x640xf32, #tpu.memory_space<vmem>>, vector<128x640xf32>
      %cst_13 = arith.constant dense<0.000000e+00> : vector<2x640xf32>
      %13 = tpu.matmul %11, %12, %cst_13 {dimension_numbers = #tpu.dot_dimension_numbers<[1], [0], [0], [1], [0, 0, 1, 1], [], []>} : vector<2x128xf32>, vector<128x640xf32>, vector<2x640xf32> -> vector<2x640xf32>
      %c0_14 = arith.constant 0 : index
      %c0_15 = arith.constant 0 : index
      %14 = vector.load %arg4[%c0_14, %c0_15] : memref<1x640xf32, #tpu.memory_space<vmem>>, vector<1x640xf32>
      %15 = vector.broadcast %14 : vector<1x640xf32> to vector<2x640xf32>
      %16 = arith.addf %13, %15 : vector<2x640xf32>
      %17 = vector.extract_strided_slice %16 {offsets = [0, 0], sizes = [2, 128], strides = [1, 1]} : vector<2x640xf32> to vector<2x128xf32>
      %18 = vector.extract_strided_slice %16 {offsets = [0, 128], sizes = [2, 128], strides = [1, 1]} : vector<2x640xf32> to vector<2x128xf32>
      %19 = vector.extract_strided_slice %16 {offsets = [0, 256], sizes = [2, 128], strides = [1, 1]} : vector<2x640xf32> to vector<2x128xf32>
      %20 = arith.maximumf %17, %18 : vector<2x128xf32>
      %21 = arith.maximumf %20, %19 : vector<2x128xf32>
      %22 = arith.subf %17, %21 : vector<2x128xf32>
      %23 = math.exp %22 : vector<2x128xf32>
      %24 = arith.subf %18, %21 : vector<2x128xf32>
      %25 = math.exp %24 : vector<2x128xf32>
      %26 = arith.subf %19, %21 : vector<2x128xf32>
      %27 = math.exp %26 : vector<2x128xf32>
      %28 = arith.addf %23, %25 : vector<2x128xf32>
      %29 = arith.addf %28, %27 : vector<2x128xf32>
      %cst_16 = arith.constant 0.000000e+00 : f32
      %30 = vector.broadcast %cst_16 : f32 to vector<2x128xf32>
      %31 = vector.extract_strided_slice %16 {offsets = [0, 384], sizes = [2, 128], strides = [1, 1]} : vector<2x640xf32> to vector<2x128xf32>
      %32 = arith.negf %31 : vector<2x128xf32>
      %33 = math.exp %32 : vector<2x128xf32>
      %cst_17 = arith.constant 1.000000e+00 : f32
      %34 = vector.broadcast %cst_17 : f32 to vector<2x128xf32>
      %35 = arith.addf %34, %33 : vector<2x128xf32>
      %36 = arith.divf %34, %35 : vector<2x128xf32>
      %37 = arith.mulf %23, %36 : vector<2x128xf32>
      %38 = arith.addf %30, %37 : vector<2x128xf32>
      %39 = vector.extract_strided_slice %16 {offsets = [0, 512], sizes = [2, 128], strides = [1, 1]} : vector<2x640xf32> to vector<2x128xf32>
      %40 = arith.negf %39 : vector<2x128xf32>
      %41 = math.exp %40 : vector<2x128xf32>
      %cst_18 = arith.constant 1.000000e+00 : f32
      %42 = vector.broadcast %cst_18 : f32 to vector<2x128xf32>
      %43 = arith.addf %42, %41 : vector<2x128xf32>
      %44 = arith.divf %42, %43 : vector<2x128xf32>
      %45 = arith.mulf %25, %44 : vector<2x128xf32>
      %46 = arith.addf %38, %45 : vector<2x128xf32>
      %47 = math.log %46 : vector<2x128xf32>
      %48 = math.log %29 : vector<2x128xf32>
      %49 = arith.subf %47, %48 : vector<2x128xf32>
      %c0_19 = arith.constant 0 : index
      %c0_20 = arith.constant 0 : index
      %50 = vector.load %arg5[%c0_19, %c0_20] : memref<2x128xf32, #tpu.memory_space<vmem>>, vector<2x128xf32>
      tpu.vector_store %arg5[%c0_19, %c0_20], %49 {strides = array<i32>} : memref<2x128xf32, #tpu.memory_space<vmem>>, vector<2x128xf32>,
    } else {
    }
    return
  }
  func.func @transform_0(%arg0: i32, %arg1: i32) -> (i32, i32, i32) {
    %c0_i32 = arith.constant 0 : i32
    %c0_i32_0 = arith.constant 0 : i32
    return %arg0, %arg1, %c0_i32 : i32, i32, i32
  }
  func.func @transform_1(%arg0: i32, %arg1: i32) -> (i32, i32) {
    %c0_i32 = arith.constant 0 : i32
    %c0_i32_0 = arith.constant 0 : i32
    %c0_i32_1 = arith.constant 0 : i32
    return %c0_i32, %c0_i32_0 : i32, i32
  }
  func.func @transform_2(%arg0: i32, %arg1: i32) -> (i32, i32) {
    %c0_i32 = arith.constant 0 : i32
    %c0_i32_0 = arith.constant 0 : i32
    %c0_i32_1 = arith.constant 0 : i32
    return %c0_i32, %c0_i32_0 : i32, i32
  }
  func.func @transform_3(%arg0: i32, %arg1: i32) -> (i32, i32) {
    %c0_i32 = arith.constant 0 : i32
    %c0_i32_0 = arith.constant 0 : i32
    return %arg0, %c0_i32 : i32, i32
  }
}

</mosaic_0001>

<llo_original>
// kernel: moe_forward.1
$region0: #{moe_forward.1}
  #allocation0 [shape = 'u32[]', space=smem, size = 0x4, offset = 0x4, fixed_abs, tag = 'smem constant byte address 0x4 - core index']
  #allocation1 [shape = 'u32[144,128]{1,0:T(1,128)}', space=vmem, size = 0x12000, scoped, tag = 'internal scratch']
  #allocation2 [shape = 'f32[2,128]{1,0:T(2,128)}', space=vmem, size = 0x400, scoped, tag = 'scratch operand']
  %s0 = inlined_call_operand.vmem [shape: f32[2,2,128], index: 0, kind: input, shape index: {}]
  %s1 = inlined_call_operand.hbm [shape: f32[128,640], index: 1, kind: input, shape index: {}]
  %s2 = inlined_call_operand.vmem [shape: f32[1,640], index: 2, kind: input, shape index: {}]
  %s3 = inlined_call_operand.hbm [shape: f32[2,128], index: 3, kind: output, shape index: {}]
  %s4 = sld [smem:[#allocation0]]
  $region34: #{moe_forward.1} parent=0
    _
  %s6 = ssub.s32 1, %s4
  %s7 = scalar_select 0, %s6, %s4
  $region1: #{moe_forward.1} parent=0
    #allocation3 [shape = 'u8[327680]{0}', space=vmem, size = 0x50000, scoped, tag = 'input window, operand 1, single buffered']
    #allocation4 [shape = 's32[1]{0}', space=sflag, size = 0x4, scoped, tag = 'scoped memory for moe_forward.1']
    #allocation5 [shape = 's32[1]{0}', space=sflag, size = 0x4, scoped, tag = 'scoped memory for moe_forward.1']
    #allocation6 [shape = 'u8[1024]{0}', space=vmem, size = 0x400, scoped, tag = 'output window, operand 0, single buffered']
    %8 = vsyncpa [#allocation4], 0
    %9 = vsyncpa [#allocation5], 0
    // Predicated region
    $region2: #{moe_forward.1} parent=1 // pred_check
      _
    $region3: #{moe_forward.1} parent=1 // pred_check_branch
      %11 = sbr.rel (0) target = $region5
    $region4: #{moe_forward.1} parent=1 // pred_region
      _
    $region5: #{moe_forward.1} parent=1 // pred_fallthru
      _
    // Predicated region
    $region6: #{moe_forward.1} parent=1 // pred_check
      _
    $region7: #{moe_forward.1} parent=1 // pred_check_branch
      %13 = sbr.rel (0) target = $region9
    $region8: #{moe_forward.1} parent=1 // pred_region
      %s15 = ssub.s32 10240, 10240
      %16 = vsyncadd [#allocation4], %s15
      %s17 = sshll.u32 [#allocation3], 4
      %s18 = int_to_ptr.vmem [resolvable:$true] %s17
      %23 = dma.hbm_to_vmem [thread:$0]  %s1, 10240, %s18, [#allocation4], 640, 640, 40
    $region9: #{moe_forward.1} parent=1 // pred_fallthru
      _
    // Predicated region
    $region10: #{moe_forward.1} parent=1 // pred_check
      _
    $region11: #{moe_forward.1} parent=1 // pred_check_branch
      %25 = sbr.rel (0) target = $region13
    $region12: #{moe_forward.1} parent=1 // pred_region
      _
    $region13: #{moe_forward.1} parent=1 // pred_fallthru
      _
    // Predicated region
    $region14: #{moe_forward.1} parent=1 // pred_check
      _
    $region15: #{moe_forward.1} parent=1 // pred_check_branch
      %27 = sbr.rel (0) target = $region17
    $region16: #{moe_forward.1} parent=1 // pred_region
      %28 = dma.done [#allocation4], 10240
    $region17: #{moe_forward.1} parent=1 // pred_fallthru
      _
    %p29 = scmp.eq.s32.totalorder 0, 0
    // Predicated region
    $region18: #{moe_forward.1} parent=1 // pred_check
      %p30 = pneg %p29
    $region19: #{moe_forward.1} parent=1 // pred_check_branch
      %32 = sbr.rel (%p30) target = $region21
    $region20: #{moe_forward.1} parent=1 // pred_region
      %33 = vst [vmem:[#allocation2] sm:$0x3] 0.0
    $region21: #{moe_forward.1} parent=1 // pred_fallthru
      _
    %v34 = vld [vmem:[%s0] sm:$0x3]
    %v35 = vld [vmem:[%s0 + $0x2] sm:$0x3]
    %v36 = vld [vmem:[#allocation2] sm:$0x3]
    %vm37 = vcmask 1041408
    %v38 = vsel %vm37, %v34, 0.0
    %v39 = vrot.slane %v38, 4
    %v40 = vadd.f32 %v38, %v39
    %v41 = vrot.slane %v40, 2
    %v42 = vadd.f32 %v40, %v41
    %v43 = vrot.slane %v42, 1
    %v44 = vadd.f32 %v42, %v43
    %v45 = vsel %vm37, %v35, 0.0
    %v46 = vrot.slane %v45, 4
    %v47 = vadd.f32 %v45, %v46
    %v48 = vrot.slane %v47, 2
    %v49 = vadd.f32 %v47, %v48
    %v50 = vrot.slane %v49, 1
    %v51 = vadd.f32 %v49, %v50
    %vm54 = vcmask 1041409
    %v55 = vsel %vm54, %v51, %v44
    %v57 = vadd.f32 %v36, %v55
    %58 = vst [vmem:[#allocation2] sm:$0x3] %v57
    // Predicated region
    $region22: #{moe_forward.1} parent=1 // pred_check
      %p59 = pneg %p29
    $region23: #{moe_forward.1} parent=1 // pred_check_branch
      %61 = sbr.rel (%p59) target = $region25
    $region24: #{moe_forward.1} parent=1 // pred_region
      %v62 = vld [vmem:[#allocation2] sm:$0x3]
      %v63 = vld [vmem:[#allocation3] sm:$0xff]
      %v64 = vld [vmem:[#allocation3 + $0x8] sm:$0xff]
      %v65 = vld [vmem:[#allocation3 + $0x10] sm:$0xff]
      %v66 = vld [vmem:[#allocation3 + $0x18] sm:$0xff]
      %v67 = vld [vmem:[#allocation3 + $0x20] sm:$0xff]
      %v68 = vld [vmem:[#allocation3 + $0x28] sm:$0xff]
      %v69 = vld [vmem:[#allocation3 + $0x30] sm:$0xff]
      %v70 = vld [vmem:[#allocation3 + $0x38] sm:$0xff]
      %v71 = vld [vmem:[#allocation3 + $0x40] sm:$0xff]
      %v72 = vld [vmem:[#allocation3 + $0x48] sm:$0xff]
      %v73 = vld [vmem:[#allocation3 + $0x50] sm:$0xff]
      %v74 = vld [vmem:[#allocation3 + $0x58] sm:$0xff]
      %v75 = vld [vmem:[#allocation3 + $0x60] sm:$0xff]
      %v76 = vld [vmem:[#allocation3 + $0x68] sm:$0xff]
      %v77 = vld [vmem:[#allocation3 + $0x70] sm:$0xff]
      %v78 = vld [vmem:[#allocation3 + $0x78] sm:$0xff]
      %v79 = vld [vmem:[#allocation3 + $0x80] sm:$0xff]
      %v80 = vld [vmem:[#allocation3 + $0x88] sm:$0xff]
      %v81 = vld [vmem:[#allocation3 + $0x90] sm:$0xff]
      %v82 = vld [vmem:[#allocation3 + $0x98] sm:$0xff]
      %v83 = vld [vmem:[#allocation3 + $0xa0] sm:$0xff]
      %v84 = vld [vmem:[#allocation3 + $0xa8] sm:$0xff]
      %v85 = vld [vmem:[#allocation3 + $0xb0] sm:$0xff]
      %v86 = vld [vmem:[#allocation3 + $0xb8] sm:$0xff]
      %v87 = vld [vmem:[#allocation3 + $0xc0] sm:$0xff]
      %v88 = vld [vmem:[#allocation3 + $0xc8] sm:$0xff]
      %v89 = vld [vmem:[#allocation3 + $0xd0] sm:$0xff]
      %v90 = vld [vmem:[#allocation3 + $0xd8] sm:$0xff]
      %v91 = vld [vmem:[#allocation3 + $0xe0] sm:$0xff]
      %v92 = vld [vmem:[#allocation3 + $0xe8] sm:$0xff]
      %v93 = vld [vmem:[#allocation3 + $0xf0] sm:$0xff]
      %v94 = vld [vmem:[#allocation3 + $0xf8] sm:$0xff]
      %v95 = vld [vmem:[#allocation3 + $0x100] sm:$0xff]
      %v96 = vld [vmem:[#allocation3 + $0x108] sm:$0xff]
      %v97 = vld [vmem:[#allocation3 + $0x110] sm:$0xff]
      %v98 = vld [vmem:[#allocation3 + $0x118] sm:$0xff]
      %v99 = vld [vmem:[#allocation3 + $0x120] sm:$0xff]
      %v100 = vld [vmem:[#allocation3 + $0x128] sm:$0xff]
      %v101 = vld [vmem:[#allocation3 + $0x130] sm:$0xff]
      %v102 = vld [vmem:[#allocation3 + $0x138] sm:$0xff]
      %v103 = vld [vmem:[#allocation3 + $0x140] sm:$0xff]
      %v104 = vld [vmem:[#allocation3 + $0x148] sm:$0xff]
      %v105 = vld [vmem:[#allocation3 + $0x150] sm:$0xff]
      %v106 = vld [vmem:[#allocation3 + $0x158] sm:$0xff]
      %v107 = vld [vmem:[#allocation3 + $0x160] sm:$0xff]
      %v108 = vld [vmem:[#allocation3 + $0x168] sm:$0xff]
      %v109 = vld [vmem:[#allocation3 + $0x170] sm:$0xff]
      %v110 = vld [vmem:[#allocation3 + $0x178] sm:$0xff]
      %v111 = vld [vmem:[#allocation3 + $0x180] sm:$0xff]
      %v112 = vld [vmem:[#allocation3 + $0x188] sm:$0xff]
      %v113 = vld [vmem:[#allocation3 + $0x190] sm:$0xff]
      %v114 = vld [vmem:[#allocation3 + $0x198] sm:$0xff]
      %v115 = vld [vmem:[#allocation3 + $0x1a0] sm:$0xff]
      %v116 = vld [vmem:[#allocation3 + $0x1a8] sm:$0xff]
      %v117 = vld [vmem:[#allocation3 + $0x1b0] sm:$0xff]
      %v118 = vld [vmem:[#allocation3 + $0x1b8] sm:$0xff]
      %v119 = vld [vmem:[#allocation3 + $0x1c0] sm:$0xff]
      %v120 = vld [vmem:[#allocation3 + $0x1c8] sm:$0xff]
      %v121 = vld [vmem:[#allocation3 + $0x1d0] sm:$0xff]
      %v122 = vld [vmem:[#allocation3 + $0x1d8] sm:$0xff]
      %v123 = vld [vmem:[#allocation3 + $0x1e0] sm:$0xff]
      %v124 = vld [vmem:[#allocation3 + $0x1e8] sm:$0xff]
      %v125 = vld [vmem:[#allocation3 + $0x1f0] sm:$0xff]
      %v126 = vld [vmem:[#allocation3 + $0x1f8] sm:$0xff]
      %v127 = vld [vmem:[#allocation3 + $0x200] sm:$0xff]
      %v128 = vld [vmem:[#allocation3 + $0x208] sm:$0xff]
      %v129 = vld [vmem:[#allocation3 + $0x210] sm:$0xff]
      %v130 = vld [vmem:[#allocation3 + $0x218] sm:$0xff]
      %v131 = vld [vmem:[#allocation3 + $0x220] sm:$0xff]
      %v132 = vld [vmem:[#allocation3 + $0x228] sm:$0xff]
      %v133 = vld [vmem:[#allocation3 + $0x230] sm:$0xff]
      %v134 = vld [vmem:[#allocation3 + $0x238] sm:$0xff]
      %v135 = vld [vmem:[#allocation3 + $0x240] sm:$0xff]
      %v136 = vld [vmem:[#allocation3 + $0x248] sm:$0xff]
      %v137 = vld [vmem:[#allocation3 + $0x250] sm:$0xff]
      %v138 = vld [vmem:[#allocation3 + $0x258] sm:$0xff]
      %v139 = vld [vmem:[#allocation3 + $0x260] sm:$0xff]
      %v140 = vld [vmem:[#allocation3 + $0x268] sm:$0xff]
      %v141 = vld [vmem:[#allocation3 + $0x270] sm:$0xff]
      %v142 = vld [vmem:[#allocation3 + $0x278] sm:$0xff]
      %v143 = vld [vmem:[%s2] sm:$0x1f]
      %v145 = vlaneseq
      %v146 = vshrl.u32 %v145, 7
      %v147 = vsub.s32 0, %v146
      %v148 = vrot.slane %v143, %v147
      %v149 = vlaneseq
      %v150 = vshrl.u32 %v149, 7
      %v151 = vsub.s32 1, %v150
      %v152 = vrot.slane %v143, %v151
      %v153 = vlaneseq
      %v154 = vshrl.u32 %v153, 7
      %v155 = vsub.s32 2, %v154
      %v156 = vrot.slane %v143, %v155
      %v157 = vlaneseq
      %v158 = vshrl.u32 %v157, 7
      %v159 = vsub.s32 3, %v158
      %v160 = vrot.slane %v143, %v159
      %v161 = vlaneseq
      %v162 = vshrl.u32 %v161, 7
      %v163 = vsub.s32 4, %v162
      %v164 = vrot.slane %v143, %v163
      %170 = vmatprep.subr.mxu0 %v64
      %171 = vmatpush1.msra.mxu0 %v63
      %172 = vmatprep.subr.mxu0 %v69
      %173 = vmatpush1.msra.mxu0 %v68
      %174 = vmatprep.subr.mxu0 %v74
      %175 = vmatpush1.msra.mxu0 %v73
      %176 = vmatprep.subr.mxu0 %v79
      %177 = vmatpush1.msra.mxu0 %v78
      %178 = vmatprep.subr.mxu0 %v84
      %179 = vmatpush1.msra.mxu0 %v83
      %180 = vmatprep.subr.mxu0 %v89
      %181 = vmatpush1.msra.mxu0 %v88
      %182 = vmatprep.subr.mxu0 %v94
      %183 = vmatpush1.msra.mxu0 %v93
      %184 = vmatprep.subr.mxu0 %v99
      %185 = vmatpush1.msra.mxu0 %v98
      %186 = vmatprep.subr.mxu0 %v104
      %187 = vmatpush1.msra.mxu0 %v103
      %188 = vmatprep.subr.mxu0 %v109
      %189 = vmatpush1.msra.mxu0 %v108
      %190 = vmatprep.subr.mxu0 %v114
      %191 = vmatpush1.msra.mxu0 %v113
      %192 = vmatprep.subr.mxu0 %v119
      %193 = vmatpush1.msra.mxu0 %v118
      %194 = vmatprep.subr.mxu0 %v124
      %195 = vmatpush1.msra.mxu0 %v123
      %196 = vmatprep.subr.mxu0 %v129
      %197 = vmatpush1.msra.mxu0 %v128
      %198 = vmatprep.subr.mxu0 %v134
      %199 = vmatpush1.msra.mxu0 %v133
      %200 = vmatprep.subr.mxu0 %v139
      %201 = vmatpush1.msra.mxu0 %v138
      %202 = vmatprep.subr.mxu0 0.0
      %203 = vmatpush1.msra.mxu0 0.0
      %204 = vmatprep.subr.mxu0 0.0
      %205 = vmatpush1.msra.mxu0 0.0
      %206 = vmatprep.subr.mxu0 0.0
      %207 = vmatpush1.msra.mxu0 0.0
      %208 = vmatprep.subr.mxu0 0.0
      %209 = vmatpush1.msra.mxu0 0.0
      %210 = vmatprep.subr.mxu0 0.0
      %211 = vmatpush1.msra.mxu0 0.0
      %212 = vmatprep.subr.mxu0 0.0
      %213 = vmatpush1.msra.mxu0 0.0
      %214 = vmatprep.subr.mxu0 0.0
      %215 = vmatpush1.msra.mxu0 0.0
      %216 = vmatprep.subr.mxu0 0.0
      %217 = vmatpush1.msra.mxu0 0.0
      %218 = vmatprep.subr.mxu0 0.0
      %219 = vmatpush1.msra.mxu0 0.0
      %220 = vmatprep.subr.mxu0 0.0
      %221 = vmatpush1.msra.mxu0 0.0
      %222 = vmatprep.subr.mxu0 0.0
      %223 = vmatpush1.msra.mxu0 0.0
      %224 = vmatprep.subr.mxu0 0.0
      %225 = vmatpush1.msra.mxu0 0.0
      %226 = vmatprep.subr.mxu0 0.0
      %227 = vmatpush1.msra.mxu0 0.0
      %228 = vmatprep.subr.mxu0 0.0
      %229 = vmatpush1.msra.mxu0 0.0
      %230 = vmatprep.subr.mxu0 0.0
      %231 = vmatpush1.msra.mxu0 0.0
      %232 = vmatprep.subr.mxu0 0.0
      %233 = vmatpush1.msra.mxu0 0.0
      %234 = vmatprep.mubr.f32.mxu0 0.0
      %235 = vmatmul.mubr.f32.gmra.mrb[0].mxu0 %v62
      %v236 = vpop.f32.mrb[0].mxu0
      %v237 = vadd.f32 %v148, %v236
      %v238 = vpop.f32.mrb[0].mxu0
      %v239 = vadd.f32 %v152, %v238
      %240 = vdwg.mxu0
      %241 = vmatprep.subr.mxu0 %v66
      %242 = vmatpush1.msra.mxu0 %v65
      %243 = vmatprep.subr.mxu0 %v71
      %244 = vmatpush1.msra.mxu0 %v70
      %245 = vmatprep.subr.mxu0 %v76
      %246 = vmatpush1.msra.mxu0 %v75
      %247 = vmatprep.subr.mxu0 %v81
      %248 = vmatpush1.msra.mxu0 %v80
      %249 = vmatprep.subr.mxu0 %v86
      %250 = vmatpush1.msra.mxu0 %v85
      %251 = vmatprep.subr.mxu0 %v91
      %252 = vmatpush1.msra.mxu0 %v90
      %253 = vmatprep.subr.mxu0 %v96
      %254 = vmatpush1.msra.mxu0 %v95
      %255 = vmatprep.subr.mxu0 %v101
      %256 = vmatpush1.msra.mxu0 %v100
      %257 = vmatprep.subr.mxu0 %v106
      %258 = vmatpush1.msra.mxu0 %v105
      %259 = vmatprep.subr.mxu0 %v111
      %260 = vmatpush1.msra.mxu0 %v110
      %261 = vmatprep.subr.mxu0 %v116
      %262 = vmatpush1.msra.mxu0 %v115
      %263 = vmatprep.subr.mxu0 %v121
      %264 = vmatpush1.msra.mxu0 %v120
      %265 = vmatprep.subr.mxu0 %v126
      %266 = vmatpush1.msra.mxu0 %v125
      %267 = vmatprep.subr.mxu0 %v131
      %268 = vmatpush1.msra.mxu0 %v130
      %269 = vmatprep.subr.mxu0 %v136
      %270 = vmatpush1.msra.mxu0 %v135
      %271 = vmatprep.subr.mxu0 %v141
      %272 = vmatpush1.msra.mxu0 %v140
      %273 = vmatprep.subr.mxu0 0.0
      %274 = vmatpush1.msra.mxu0 0.0
      %275 = vmatprep.subr.mxu0 0.0
      %276 = vmatpush1.msra.mxu0 0.0
      %277 = vmatprep.subr.mxu0 0.0
      %278 = vmatpush1.msra.mxu0 0.0
      %279 = vmatprep.subr.mxu0 0.0
      %280 = vmatpush1.msra.mxu0 0.0
      %281 = vmatprep.subr.mxu0 0.0
      %282 = vmatpush1.msra.mxu0 0.0
      %283 = vmatprep.subr.mxu0 0.0
      %284 = vmatpush1.msra.mxu0 0.0
      %285 = vmatprep.subr.mxu0 0.0
      %286 = vmatpush1.msra.mxu0 0.0
      %287 = vmatprep.subr.mxu0 0.0
      %288 = vmatpush1.msra.mxu0 0.0
      %289 = vmatprep.subr.mxu0 0.0
      %290 = vmatpush1.msra.mxu0 0.0
      %291 = vmatprep.subr.mxu0 0.0
      %292 = vmatpush1.msra.mxu0 0.0
      %293 = vmatprep.subr.mxu0 0.0
      %294 = vmatpush1.msra.mxu0 0.0
      %295 = vmatprep.subr.mxu0 0.0
      %296 = vmatpush1.msra.mxu0 0.0
      %297 = vmatprep.subr.mxu0 0.0
      %298 = vmatpush1.msra.mxu0 0.0
      %299 = vmatprep.subr.mxu0 0.0
      %300 = vmatpush1.msra.mxu0 0.0
      %301 = vmatprep.subr.mxu0 0.0
      %302 = vmatpush1.msra.mxu0 0.0
      %303 = vmatprep.subr.mxu0 0.0
      %304 = vmatpush1.msra.mxu0 0.0
      %305 = vmatprep.mubr.f32.mxu0 0.0
      %306 = vmatmul.mubr.f32.gmra.mrb[0].mxu0 %v62
      %v307 = vpop.f32.mrb[0].mxu0
      %v308 = vadd.f32 %v156, %v307
      %v309 = vpop.f32.mrb[0].mxu0
      %v310 = vadd.f32 %v160, %v309
      %311 = vdwg.mxu0
      %312 = vmatprep.subr.mxu0 0.0
      %313 = vmatpush1.msra.mxu0 %v67
      %314 = vmatprep.subr.mxu0 0.0
      %315 = vmatpush1.msra.mxu0 %v72
      %316 = vmatprep.subr.mxu0 0.0
      %317 = vmatpush1.msra.mxu0 %v77
      %318 = vmatprep.subr.mxu0 0.0
      %319 = vmatpush1.msra.mxu0 %v82
      %320 = vmatprep.subr.mxu0 0.0
      %321 = vmatpush1.msra.mxu0 %v87
      %322 = vmatprep.subr.mxu0 0.0
      %323 = vmatpush1.msra.mxu0 %v92
      %324 = vmatprep.subr.mxu0 0.0
      %325 = vmatpush1.msra.mxu0 %v97
      %326 = vmatprep.subr.mxu0 0.0
      %327 = vmatpush1.msra.mxu0 %v102
      %328 = vmatprep.subr.mxu0 0.0
      %329 = vmatpush1.msra.mxu0 %v107
      %330 = vmatprep.subr.mxu0 0.0
      %331 = vmatpush1.msra.mxu0 %v112
      %332 = vmatprep.subr.mxu0 0.0
      %333 = vmatpush1.msra.mxu0 %v117
      %334 = vmatprep.subr.mxu0 0.0
      %335 = vmatpush1.msra.mxu0 %v122
      %336 = vmatprep.subr.mxu0 0.0
      %337 = vmatpush1.msra.mxu0 %v127
      %338 = vmatprep.subr.mxu0 0.0
      %339 = vmatpush1.msra.mxu0 %v132
      %340 = vmatprep.subr.mxu0 0.0
      %341 = vmatpush1.msra.mxu0 %v137
      %342 = vmatprep.subr.mxu0 0.0
      %343 = vmatpush1.msra.mxu0 %v142
      %344 = vmatprep.subr.mxu0 0.0
      %345 = vmatpush1.msra.mxu0 0.0
      %346 = vmatprep.subr.mxu0 0.0
      %347 = vmatpush1.msra.mxu0 0.0
      %348 = vmatprep.subr.mxu0 0.0
      %349 = vmatpush1.msra.mxu0 0.0
      %350 = vmatprep.subr.mxu0 0.0
      %351 = vmatpush1.msra.mxu0 0.0
      %352 = vmatprep.subr.mxu0 0.0
      %353 = vmatpush1.msra.mxu0 0.0
      %354 = vmatprep.subr.mxu0 0.0
      %355 = vmatpush1.msra.mxu0 0.0
      %356 = vmatprep.subr.mxu0 0.0
      %357 = vmatpush1.msra.mxu0 0.0
      %358 = vmatprep.subr.mxu0 0.0
      %359 = vmatpush1.msra.mxu0 0.0
      %360 = vmatprep.subr.mxu0 0.0
      %361 = vmatpush1.msra.mxu0 0.0
      %362 = vmatprep.subr.mxu0 0.0
      %363 = vmatpush1.msra.mxu0 0.0
      %364 = vmatprep.subr.mxu0 0.0
      %365 = vmatpush1.msra.mxu0 0.0
      %366 = vmatprep.subr.mxu0 0.0
      %367 = vmatpush1.msra.mxu0 0.0
      %368 = vmatprep.subr.mxu0 0.0
      %369 = vmatpush1.msra.mxu0 0.0
      %370 = vmatprep.subr.mxu0 0.0
      %371 = vmatpush1.msra.mxu0 0.0
      %372 = vmatprep.subr.mxu0 0.0
      %373 = vmatpush1.msra.mxu0 0.0
      %374 = vmatprep.subr.mxu0 0.0
      %375 = vmatpush1.msra.mxu0 0.0
      %376 = vmatprep.mubr.f32.mxu0 0.0
      %377 = vmatmul.mubr.f32.gmra.mrb[0].mxu0 %v62
      %v378 = vpop.f32.mrb[0].mxu0
      %v379 = vadd.f32 %v164, %v378
      %v380 = vpop.f32.mrb[0].mxu0
      %381 = vdwg.mxu0
      %v382 = vmax.f32 %v237, %v239
      %v383 = vmax.f32 %v382, %v308
      %v384 = vsub.f32 %v237, %v383
      %v385 = vmul.f32 %v384, 1.442695
      %v386 = vpow.pop %v385
      %v387 = vsub.f32 %v239, %v383
      %v388 = vmul.f32 %v387, 1.442695
      %v389 = vpow.pop %v388
      %v390 = vsub.f32 %v308, %v383
      %v391 = vmul.f32 %v390, 1.442695
      %v392 = vpow.pop %v391
      %v393 = vadd.f32 %v386, %v389
      %v394 = vadd.f32 %v393, %v392
      %v395 = vxor.u32 %v310, 2147483648
      %v396 = vmul.f32 %v395, 1.442695
      %v397 = vpow.pop %v396
      %v398 = vadd.f32 %v397, 1.0
      %v399 = vrcp.pop %v398
      %v400 = vmul.f32 1.0, %v399
      %v401 = vmul.f32 %v386, %v400
      %v402 = vadd.f32 %v401, 0.0
      %v403 = vxor.u32 %v379, 2147483648
      %v404 = vmul.f32 %v403, 1.442695
      %v405 = vpow.pop %v404
      %v406 = vadd.f32 %v405, 1.0
      %v407 = vrcp.pop %v406
      %v408 = vmul.f32 1.0, %v407
      %v409 = vmul.f32 %v389, %v408
      %v410 = vadd.f32 %v402, %v409
      %v411 = vlog2.pop %v410
      %v412 = vmul.f32 %v411, 0.6931472
      %v413 = vlog2.pop %v394
      %v414 = vmul.f32 %v413, 0.6931472
      %v415 = vsub.f32 %v412, %v414
      %416 = vst [vmem:[#allocation6] sm:$0x3] %v415
    $region25: #{moe_forward.1} parent=1 // pred_fallthru
      _
    // Predicated region
    $region26: #{moe_forward.1} parent=1 // pred_check
      _
    $region27: #{moe_forward.1} parent=1 // pred_check_branch
      %418 = sbr.rel (0) target = $region29
    $region28: #{moe_forward.1} parent=1 // pred_region
      %s420 = ssub.s32 32, 32
      %421 = vsyncadd [#allocation5], %s420
      %s423 = sshll.u32 [#allocation6], 4
      %s424 = int_to_ptr.vmem [resolvable:$true] %s423
      %426 = dma.vmem_to_hbm [thread:$0]  %s424, 32, %s3, [#allocation5]
    $region29: #{moe_forward.1} parent=1 // pred_fallthru
      _
    // Predicated region
    $region30: #{moe_forward.1} parent=1 // pred_check
      _
    $region31: #{moe_forward.1} parent=1 // pred_check_branch
      %428 = sbr.rel (0) target = $region33
    $region32: #{moe_forward.1} parent=1 // pred_region
      %429 = dma.done [#allocation5], 32
    $region33: #{moe_forward.1} parent=1 // pred_fallthru
      _
    %430 = vsyncpa [#allocation4], 1
    %431 = vsyncpa [#allocation5], 1

</llo_original>
